<compile_context>
chip_gen: v7x
topology: tpu7x:2x2x1
jax: 0.10.0
libtpu: 0.0.40
codegen_flags: <defaults>
</compile_context>

<pallas_src>
import jax
import jax.numpy as jnp
from jax import lax
from jax.experimental import pallas as pl
from jax.experimental.pallas import tpu as pltpu


# ---------------------------------------------------------------------------
# Tiling plan
# ---------------------------------------------------------------------------
def _plan(shape, dtype, block_bytes):
    """Pick (tile, n_k, n_par, k_per_par, Bb, needs_mask) for a (B,C,H,W) input."""
    B, C, H, W = shape
    HW = H * W
    itemsize = jnp.dtype(dtype).itemsize

    # k tile: ~block_bytes per x block, multiple of 128 lanes (or full HW dim).
    lanes = max(128, (block_bytes // max(1, C * itemsize)) // 128 * 128)
    if HW <= lanes:
        tile, n_k = HW, 1
    else:
        tile = int(lanes)
        n_k = -(-HW // tile)

    # Megacore: when the batch axis alone can't occupy two TensorCores, split
    # the HW reduction across a parallel axis of size 2.
    n_par = 2 if (B == 1 and n_k >= 2) else 1
    k_per_par = -(-n_k // n_par)

    # Batch blocking for tiny single-tile layers (large C, small HW).
    Bb = 1
    if n_k == 1 and n_par == 1:
        cap = max(1, int(block_bytes // max(1, C * HW * itemsize)))
        for d in range(min(B, cap), 0, -1):
            if B % d == 0:
                Bb = d
                break

    needs_mask = (n_par * k_per_par * tile) != HW
    return dict(B=B, C=C, HW=HW, tile=tile, n_k=n_k, n_par=n_par,
                k_per_par=k_per_par, Bb=Bb, needs_mask=needs_mask,
                itemsize=itemsize)


def _compiler_params(semantics, buffer_bytes):
    # Explicit scoped-VMEM sizing: resident buffers + slack, capped well under
    # v7x's 64 MiB physical VMEM so one config is valid on v5e/v6e/v7x.
    limit = int(min(48 << 20, max(16 << 20, buffer_bytes + (4 << 20))))
    return pltpu.CompilerParams(dimension_semantics=semantics,
                                vmem_limit_bytes=limit)


# ---------------------------------------------------------------------------
# Kernel 1: unscaled partial Gram matrices -> (B, n_par, C, C) float32.
# Summing over axis 1 gives F @ F^T per batch element (scale applied in glue).
# ---------------------------------------------------------------------------
def _partial_gram(xf, plan):
    B, C = plan["B"], plan["C"]
    HW, tile = plan["HW"], plan["tile"]
    n_k, n_par = plan["n_k"], plan["n_par"]
    kpp, Bb = plan["k_per_par"], plan["Bb"]
    needs_mask = plan["needs_mask"]
    oob_k = n_par * kpp > n_k   # padded k slots exist (odd n_k split across cores)

    def x_index(bi, p, k):
        kk = p * kpp + k
        if oob_k:
            kk = jnp.minimum(kk, n_k - 1)   # duplicate fetch; masked to zero below
        return (bi, 0, kk)

    def kernel(x_ref, g_ref, acc_ref):
        p = pl.program_id(1)
        k = pl.program_id(2)

        @pl.when(k == 0)
        def _():
            acc_ref[...] = jnp.zeros_like(acc_ref)

        f = x_ref[...]                                     # (Bb, C, tile)
        if needs_mask:
            # Ragged last tile / padded core-split slot: zero out-of-range lanes.
            start = (p * kpp + k) * tile
            col = lax.broadcasted_iota(jnp.int32, f.shape, f.ndim - 1)
            f = jnp.where(col + start < HW, f, jnp.zeros_like(f))

        if Bb == 1:
            f2 = f[0]                                      # (C, tile)
            acc_ref[0] += lax.dot_general(
                f2, f2, dimension_numbers=(((1,), (1,)), ((), ())),
                preferred_element_type=jnp.float32)
        else:
            acc_ref[...] += lax.dot_general(
                f, f, dimension_numbers=(((2,), (2,)), ((0,), (0,))),
                preferred_element_type=jnp.float32)

        @pl.when(k == kpp - 1)
        def _():
            g_ref[...] = acc_ref[...][:, None, :, :]

    x_bytes = Bb * C * tile * plan["itemsize"]
    g_bytes = Bb * C * C * 4
    return pl.pallas_call(
        kernel,
        out_shape=jax.ShapeDtypeStruct((B, n_par, C, C), jnp.float32),
        grid_spec=pltpu.PrefetchScalarGridSpec(
            num_scalar_prefetch=0,
            grid=(B // Bb, n_par, kpp),
            in_specs=[pl.BlockSpec((Bb, C, tile), x_index)],
            out_specs=pl.BlockSpec((Bb, 1, C, C), lambda bi, p, k: (bi, p, 0, 0)),
            scratch_shapes=[pltpu.VMEM((Bb, C, C), jnp.float32)],
        ),
        compiler_params=_compiler_params(
            ("parallel", "parallel", "arbitrary"),
            2 * x_bytes + 2 * g_bytes + g_bytes),
    )(xf)


# ---------------------------------------------------------------------------
# Kernel 2: fused Gram accumulation + MSE-vs-target finalize.
# Per-batch-block sum((G*scale - target_G)^2) goes to a tiny SMEM output;
# G never round-trips HBM.
# ---------------------------------------------------------------------------
def _fused_loss(xf, tg, plan, scale):
    B, C = plan["B"], plan["C"]
    HW, tile, n_k, Bb = plan["HW"], plan["tile"], plan["n_k"], plan["Bb"]
    needs_mask = plan["needs_mask"]

    def kernel(x_ref, tg_ref, o_ref, acc_ref):
        k = pl.program_id(1)

        @pl.when(k == 0)
        def _():
            acc_ref[...] = jnp.zeros_like(acc_ref)

        f = x_ref[...]                                     # (Bb, C, tile)
        if needs_mask:
            start = k * tile
            col = lax.broadcasted_iota(jnp.int32, f.shape, f.ndim - 1)
            f = jnp.where(col + start < HW, f, jnp.zeros_like(f))

        if Bb == 1:
            f2 = f[0]
            acc_ref[0] += lax.dot_general(
                f2, f2, dimension_numbers=(((1,), (1,)), ((), ())),
                preferred_element_type=jnp.float32)
        else:
            acc_ref[...] += lax.dot_general(
                f, f, dimension_numbers=(((2,), (2,)), ((0,), (0,))),
                preferred_element_type=jnp.float32)

        @pl.when(k == n_k - 1)
        def _():
            d = acc_ref[...] * scale - tg_ref[...]          # (Bb, C, C) f32
            o_ref[0, 0] = jnp.sum(d * d)

    x_bytes = Bb * C * tile * plan["itemsize"]
    g_bytes = Bb * C * C * 4
    return pl.pallas_call(
        kernel,
        out_shape=jax.ShapeDtypeStruct((B // Bb, 1), jnp.float32),
        grid_spec=pltpu.PrefetchScalarGridSpec(
            num_scalar_prefetch=0,
            grid=(B // Bb, n_k),
            in_specs=[
                pl.BlockSpec((Bb, C, tile), lambda bi, k: (bi, 0, k)),
                # Target block index is constant over k -> fetched once per batch block.
                pl.BlockSpec((Bb, C, C), lambda bi, k: (bi, 0, 0)),
            ],
            out_specs=pl.BlockSpec((1, 1), lambda bi, k: (bi, 0),
                                   memory_space=pltpu.MemorySpace.SMEM),
            scratch_shapes=[pltpu.VMEM((Bb, C, C), jnp.float32)],
        ),
        compiler_params=_compiler_params(
            ("parallel", "arbitrary"),
            2 * x_bytes + 2 * g_bytes + g_bytes),
    )(xf, tg)


# ---------------------------------------------------------------------------
# Public entry points
# ---------------------------------------------------------------------------
def gram_matrix_pallas(x: jax.Array, block_bytes: int = 3 << 20) -> jax.Array:
    """Matches torch gram_matrix: (B, C, H, W) -> (B, 1, C, C) float32."""
    B, C, H, W = x.shape
    plan = _plan(x.shape, x.dtype, block_bytes)
    xf = x.reshape(B, C, H * W)
    partial = _partial_gram(xf, plan)                       # (B, n_par, C, C)
    G = jnp.sum(partial, axis=1) * (1.0 / float(C * H * W))
    return G.reshape(B, 1, C, C)


def style_loss_pallas(x: jax.Array, target_G: jax.Array,
                      block_bytes: int = 3 << 20) -> jax.Array:
    """F.mse_loss(gram_matrix(x), target_G), Gram + MSE fused on-chip."""
    B, C, H, W = x.shape
    scale = 1.0 / float(C * H * W)
    plan = _plan(x.shape, x.dtype, block_bytes)
    xf = x.reshape(B, C, H * W)
    tg = target_G.reshape(B, C, C).astype(jnp.float32)

    if plan["n_par"] == 1:
        partial = _fused_loss(xf, tg, plan, scale)          # per-block SSE
        return jnp.sum(partial) / float(B * C * C)

    # Megacore k-split path (B == 1): combine the two partial Grams in JAX
    # glue; the (C,C) round-trip is negligible next to the feature read here.
    partial = _partial_gram(xf, plan)                       # (1, 2, C, C)
    G = jnp.sum(partial, axis=1) * scale
    return jnp.mean((G - tg) ** 2)


# ---------------------------------------------------------------------------
# Module analogue
# ---------------------------------------------------------------------------
class StyleLossValuePallas:
    def __init__(self, target_feature: jax.Array, block_bytes: int = 3 << 20):
        self._block_bytes = block_bytes
        # (Bt, 1, C, C), float32 (detached target, computed once).
        self.target_G = gram_matrix_pallas(target_feature, block_bytes)
        self.loss = None

    def forward(self, x: jax.Array) -> jax.Array:
        if x.shape[0] != self.target_G.shape[0]:
            # Batch-mismatch branch mirrors torch exactly, including the
            # (dim=(1, 2)) reduction yielding a (B, C)-shaped loss. Like the
            # torch module it relies on broadcasting (target batch of 1).
            tG = self.target_G
            if tG.ndim == 2:
                tG = tG[None]
            G = gram_matrix_pallas(x, self._block_bytes)
            self.loss = jnp.mean((G - tG) ** 2, axis=(1, 2))
        else:
            # Fused Gram + MSE: no G round-trip through HBM, single dispatch.
            self.loss = style_loss_pallas(x, self.target_G, self._block_bytes)
        return x  # forward returns its input unchanged, like the torch module


# ---------------------------------------------------------------------------
# Pure-JAX reference + self-checks
# ---------------------------------------------------------------------------
def _gram_ref(x):
    B, C, H, W = x.shape
    f = x.reshape(B, C, H * W).astype(jnp.float32)
    G = jnp.einsum("bcd,bed->bce", f, f) / float(C * H * W)
    return G.reshape(B, 1, C, C)


if __name__ == "__main__":
    key = jax.random.PRNGKey(0)
    ks = jax.random.split(key, 8)

    # Test 1: default plan — single HW tile, batch-blocked (Bb=2) fused path.
    tf1 = jax.random.normal(ks[0], (2, 4, 16, 16), dtype=jnp.float32)
    x1 = jax.random.normal(ks[1], (2, 4, 16, 16), dtype=jnp.float32)
    m1 = StyleLossValuePallas(tf1)
    out1 = jax.block_until_ready(m1.forward(x1))
    l1 = jax.block_until_ready(m1.loss)
    l1_ref = jnp.mean((_gram_ref(x1) - _gram_ref(tf1)) ** 2)
    assert out1.shape == x1.shape and jnp.allclose(out1, x1)
    assert jnp.allclose(l1, l1_ref, rtol=1e-5, atol=1e-6), (l1, l1_ref)

    # Test 2: force tiled + ragged HW (HW=240, tile=128 -> in-kernel mask).
    tf2 = jax.random.normal(ks[2], (2, 8, 12, 20), dtype=jnp.float32)
    x2 = jax.random.normal(ks[3], (2, 8, 12, 20), dtype=jnp.float32)
    m2 = StyleLossValuePallas(tf2, block_bytes=128 * 8 * 4)
    out2 = jax.block_until_ready(m2.forward(x2))
    l2 = jax.block_until_ready(m2.loss)
    l2_ref = jnp.mean((_gram_ref(x2) - _gram_ref(tf2)) ** 2)
    assert jnp.allclose(out2, x2)
    assert jnp.allclose(l2, l2_ref, rtol=1e-5, atol=1e-6), (l2, l2_ref)

    # Test 3: B == 1 -> megacore k-split (n_par=2, odd n_k -> clamp + mask).
    tf3 = jax.random.normal(ks[4], (1, 8, 16, 24), dtype=jnp.float32)
    x3 = jax.random.normal(ks[5], (1, 8, 16, 24), dtype=jnp.float32)
    m3 = StyleLossValuePallas(tf3, block_bytes=128 * 8 * 4)
    out3 = jax.block_until_ready(m3.forward(x3))
    l3 = jax.block_until_ready(m3.loss)
    l3_ref = jnp.mean((_gram_ref(x3) - _gram_ref(tf3)) ** 2)
    assert jnp.allclose(out3, x3)
    assert jnp.allclose(l3, l3_ref, rtol=1e-5, atol=1e-6), (l3, l3_ref)

    # Test 4: batch-mismatch branch (target B=1, input B=2) -> (B, C) loss.
    tf4 = jax.random.normal(ks[6], (1, 4, 16, 16), dtype=jnp.float32)
    x4 = jax.random.normal(ks[7], (2, 4, 16, 16), dtype=jnp.float32)
    m4 = StyleLossValuePallas(tf4)
    out4 = jax.block_until_ready(m4.forward(x4))
    l4 = jax.block_until_ready(m4.loss)
    l4_ref = jnp.mean((_gram_ref(x4) - _gram_ref(tf4)) ** 2, axis=(1, 2))
    assert jnp.allclose(out4, x4)
    assert l4.shape == l4_ref.shape
    assert jnp.allclose(l4, l4_ref, rtol=1e-5, atol=1e-6), (l4, l4_ref)

    print("KERNEL_OK")
</pallas_src>

<mosaic_0001>
module attributes {stable_mosaic.version = 11 : i64} {
  func.func @kernel(%arg0: i32, %arg1: i32, %arg2: i32, %arg3: memref<2x4x256xf32, #tpu.memory_space<vmem>>, %arg4: memref<2x1x4x4xf32, #tpu.memory_space<vmem>>, %arg5: memref<2x4x4xf32, #tpu.memory_space<vmem>>) attributes {dimension_semantics = [#tpu.dimension_semantics<parallel>, #tpu.dimension_semantics<parallel>, #tpu.dimension_semantics<arbitrary>], iteration_bounds = array<i64: 1, 1, 1>, scalar_prefetch = 0 : i64, scratch_operands = 1 : i64, tpu.core_type = #tpu.core_type<tc>, window_params = [{transform_indices = @transform_0, window_bounds = array<i64: 2, 4, 256>}, {transform_indices = @transform_1, window_bounds = array<i64: 2, 1, 4, 4>}]} {
    %c0_i32 = arith.constant 0 : i32
    %0 = arith.cmpi eq, %arg2, %c0_i32 : i32
    %1 = arith.extui %0 : i1 to i32
    %c0_i32_0 = arith.constant 0 : i32
    %2 = arith.cmpi ne, %1, %c0_i32_0 : i32
    scf.if %2 {
      %cst_11 = arith.constant 0.000000e+00 : f32
      %11 = vector.broadcast %cst_11 : f32 to vector<2x4x4xf32>
      %c0_12 = arith.constant 0 : index
      %c0_13 = arith.constant 0 : index
      %c0_14 = arith.constant 0 : index
      %12 = vector.load %arg5[%c0_12, %c0_13, %c0_14] : memref<2x4x4xf32, #tpu.memory_space<vmem>>, vector<2x4x4xf32>
      tpu.vector_store %arg5[%c0_12, %c0_13, %c0_14], %11 {strides = array<i32>} : memref<2x4x4xf32, #tpu.memory_space<vmem>>, vector<2x4x4xf32>,
    } else {
    }
    %c0 = arith.constant 0 : index
    %c0_1 = arith.constant 0 : index
    %c0_2 = arith.constant 0 : index
    %3 = vector.load %arg3[%c0, %c0_1, %c0_2] : memref<2x4x256xf32, #tpu.memory_space<vmem>>, vector<2x4x256xf32>
    %c0_3 = arith.constant 0 : index
    %c0_4 = arith.constant 0 : index
    %c0_5 = arith.constant 0 : index
    %4 = vector.load %arg5[%c0_3, %c0_4, %c0_5] : memref<2x4x4xf32, #tpu.memory_space<vmem>>, vector<2x4x4xf32>
    %cst = arith.constant dense<0.000000e+00> : vector<2x4x4xf32>
    %5 = tpu.matmul %3, %3, %cst {dimension_numbers = #tpu.dot_dimension_numbers<[2], [2], [1], [1], [0, 0, 0, 1, 1, 1], [0], [0]>} : vector<2x4x256xf32>, vector<2x4x256xf32>, vector<2x4x4xf32> -> vector<2x4x4xf32>
    %6 = arith.addf %4, %5 : vector<2x4x4xf32>
    %c0_6 = arith.constant 0 : index
    %c0_7 = arith.constant 0 : index
    %c0_8 = arith.constant 0 : index
    %7 = vector.load %arg5[%c0_6, %c0_7, %c0_8] : memref<2x4x4xf32, #tpu.memory_space<vmem>>, vector<2x4x4xf32>
    tpu.vector_store %arg5[%c0_6, %c0_7, %c0_8], %6 {strides = array<i32>} : memref<2x4x4xf32, #tpu.memory_space<vmem>>, vector<2x4x4xf32>,
    %c0_i32_9 = arith.constant 0 : i32
    %8 = arith.cmpi eq, %arg2, %c0_i32_9 : i32
    %9 = arith.extui %8 : i1 to i32
    %c0_i32_10 = arith.constant 0 : i32
    %10 = arith.cmpi ne, %9, %c0_i32_10 : i32
    scf.if %10 {
      %c0_11 = arith.constant 0 : index
      %c0_12 = arith.constant 0 : index
      %c0_13 = arith.constant 0 : index
      %11 = vector.load %arg5[%c0_11, %c0_12, %c0_13] : memref<2x4x4xf32, #tpu.memory_space<vmem>>, vector<2x4x4xf32>
      %12 = vector.shape_cast %11 : vector<2x4x4xf32> to vector<2x1x4x4xf32>
      %c0_14 = arith.constant 0 : index
      %c0_15 = arith.constant 0 : index
      %c0_16 = arith.constant 0 : index
      %c0_17 = arith.constant 0 : index
      %13 = vector.load %arg4[%c0_14, %c0_15, %c0_16, %c0_17] : memref<2x1x4x4xf32, #tpu.memory_space<vmem>>, vector<2x1x4x4xf32>
      tpu.vector_store %arg4[%c0_14, %c0_15, %c0_16, %c0_17], %12 {strides = array<i32>} : memref<2x1x4x4xf32, #tpu.memory_space<vmem>>, vector<2x1x4x4xf32>,
    } else {
    }
    return
  }
  func.func @transform_0(%arg0: i32, %arg1: i32, %arg2: i32) -> (i32, i32, i32) {
    %c1_i32 = arith.constant 1 : i32
    %0 = arith.muli %arg1, %c1_i32 : i32
    %1 = arith.addi %0, %arg2 : i32
    %c0_i32 = arith.constant 0 : i32
    %c0_i32_0 = arith.constant 0 : i32
    return %arg0, %c0_i32, %1 : i32, i32, i32
  }
  func.func @transform_1(%arg0: i32, %arg1: i32, %arg2: i32) -> (i32, i32, i32, i32) {
    %c0_i32 = arith.constant 0 : i32
    %c0_i32_0 = arith.constant 0 : i32
    %c0_i32_1 = arith.constant 0 : i32
    return %arg0, %arg1, %c0_i32, %c0_i32_0 : i32, i32, i32, i32
  }
}

</mosaic_0001>

<llo_original>
// kernel: tpu_custom_call.1
$region0: #{tpu_custom_call.1}
  #allocation0 [shape = 'u32[]', space=smem, size = 0x4, offset = 0x4, fixed_abs, tag = 'smem constant byte address 0x4 - core index']
  #allocation1 [shape = 'u32[144,128]{1,0:T(1,128)}', space=vmem, size = 0x12000, scoped, tag = 'internal scratch']
  #allocation2 [shape = 'f32[2,4,4]{2,1,0:T(4,128)}', space=vmem, size = 0x1000, scoped, tag = 'scratch operand']
  %s0 = inlined_call_operand.hbm [shape: f32[2,4,256], index: 0, kind: input, shape index: {}]
  %s1 = inlined_call_operand.hbm [shape: f32[2,1,4,4], index: 1, kind: output, shape index: {}]
  %s2 = sld [smem:[#allocation0]]
  $region26: #{tpu_custom_call.1} parent=0
    _
  %s4 = ssub.s32 1, %s2
  %s5 = scalar_select 0, %s4, %s2
  $region1: #{tpu_custom_call.1} parent=0
    #allocation3 [shape = 'u8[8192]{0}', space=vmem, size = 0x2000, scoped, tag = 'input window, operand 0, single buffered']
    #allocation4 [shape = 's32[1]{0}', space=sflag, size = 0x4, scoped, tag = 'scoped memory for tpu_custom_call.1']
    #allocation5 [shape = 's32[1]{0}', space=sflag, size = 0x4, scoped, tag = 'scoped memory for tpu_custom_call.1']
    #allocation6 [shape = 'u8[4096]{0}', space=vmem, size = 0x1000, scoped, tag = 'output window, operand 0, single buffered']
    %6 = vsyncpa [#allocation4], 0
    %7 = vsyncpa [#allocation5], 0
    // Predicated region
    $region2: #{tpu_custom_call.1} parent=1 // pred_check
      _
    $region3: #{tpu_custom_call.1} parent=1 // pred_check_branch
      %9 = sbr.rel (0) target = $region5
    $region4: #{tpu_custom_call.1} parent=1 // pred_region
      %s10 = sadd.s32 0, 0
      %s11 = smul.u32 2, %s10
      %s13 = ssub.s32 256, 256
      %14 = vsyncadd [#allocation4], %s13
      %s15 = smul.addr %s11, 64
      %s16 = scalar_lea.hbm %s0, %s15
      %s17 = sshll.u32 [#allocation3], 4
      %s18 = int_to_ptr.vmem [resolvable:$true] %s17
      %23 = dma.hbm_to_vmem [thread:$0]  %s16, 256, %s18, [#allocation4], 128, 128, 8
    $region5: #{tpu_custom_call.1} parent=1 // pred_fallthru
      _
    // Predicated region
    $region6: #{tpu_custom_call.1} parent=1 // pred_check
      _
    $region7: #{tpu_custom_call.1} parent=1 // pred_check_branch
      %25 = sbr.rel (0) target = $region9
    $region8: #{tpu_custom_call.1} parent=1 // pred_region
      %26 = dma.done [#allocation4], 256
    $region9: #{tpu_custom_call.1} parent=1 // pred_fallthru
      _
    %s27 = sadd.s32 0, 0
    %s28 = smul.u32 2, %s27
    %p29 = scmp.eq.s32.totalorder 0, 0
    // Predicated region
    $region10: #{tpu_custom_call.1} parent=1 // pred_check
      %p30 = pneg %p29
    $region11: #{tpu_custom_call.1} parent=1 // pred_check_branch
      %32 = sbr.rel (%p30) target = $region13
    $region12: #{tpu_custom_call.1} parent=1 // pred_region
      %vm33 = vcmask 27648
      %34 = vst.msk [vmem:[#allocation2] sm:$0xf] %vm33, 0.0
      %35 = vst.msk [vmem:[#allocation2 + $0x4] sm:$0xf] %vm33, 0.0
    $region13: #{tpu_custom_call.1} parent=1 // pred_fallthru
      _
    %v36 = vld [vmem:[#allocation3] sm:$0xff]
    %v37 = vld [vmem:[#allocation3 + $0x8] sm:$0xff]
    %v38 = vld [vmem:[#allocation2] sm:$0xf]
    %v39 = vld [vmem:[#allocation2 + $0x4] sm:$0xf]
    %v41 = vcombine.high %v36, %v36
    %43 = vmatprep.subr.mxu0 %v41
    %44 = vmatpush1.xpose.msra.mxu0 %v36
    %45 = vmatprep.subr.mxu0 0.0
    %46 = vmatpush1.xpose.msra.mxu0 0.0
    %47 = vmatprep.subr.mxu0 0.0
    %48 = vmatpush1.xpose.msra.mxu0 0.0
    %49 = vmatprep.subr.mxu0 0.0
    %50 = vmatpush1.xpose.msra.mxu0 0.0
    %51 = vmatprep.subr.mxu0 0.0
    %52 = vmatpush1.xpose.msra.mxu0 0.0
    %53 = vmatprep.subr.mxu0 0.0
    %54 = vmatpush1.xpose.msra.mxu0 0.0
    %55 = vmatprep.subr.mxu0 0.0
    %56 = vmatpush1.xpose.msra.mxu0 0.0
    %57 = vmatprep.subr.mxu0 0.0
    %58 = vmatpush1.xpose.msra.mxu0 0.0
    %59 = vmatprep.subr.mxu0 0.0
    %60 = vmatpush1.xpose.msra.mxu0 0.0
    %61 = vmatprep.subr.mxu0 0.0
    %62 = vmatpush1.xpose.msra.mxu0 0.0
    %63 = vmatprep.subr.mxu0 0.0
    %64 = vmatpush1.xpose.msra.mxu0 0.0
    %65 = vmatprep.subr.mxu0 0.0
    %66 = vmatpush1.xpose.msra.mxu0 0.0
    %67 = vmatprep.subr.mxu0 0.0
    %68 = vmatpush1.xpose.msra.mxu0 0.0
    %69 = vmatprep.subr.mxu0 0.0
    %70 = vmatpush1.xpose.msra.mxu0 0.0
    %71 = vmatprep.subr.mxu0 0.0
    %72 = vmatpush1.xpose.msra.mxu0 0.0
    %73 = vmatprep.subr.mxu0 0.0
    %74 = vmatpush1.xpose.msra.mxu0 0.0
    %75 = vmatprep.subr.mxu0 0.0
    %76 = vmatpush1.xpose.msra.mxu0 0.0
    %77 = vmatprep.subr.mxu0 0.0
    %78 = vmatpush1.xpose.msra.mxu0 0.0
    %79 = vmatprep.subr.mxu0 0.0
    %80 = vmatpush1.xpose.msra.mxu0 0.0
    %81 = vmatprep.subr.mxu0 0.0
    %82 = vmatpush1.xpose.msra.mxu0 0.0
    %83 = vmatprep.subr.mxu0 0.0
    %84 = vmatpush1.xpose.msra.mxu0 0.0
    %85 = vmatprep.subr.mxu0 0.0
    %86 = vmatpush1.xpose.msra.mxu0 0.0
    %87 = vmatprep.subr.mxu0 0.0
    %88 = vmatpush1.xpose.msra.mxu0 0.0
    %89 = vmatprep.subr.mxu0 0.0
    %90 = vmatpush1.xpose.msra.mxu0 0.0
    %91 = vmatprep.subr.mxu0 0.0
    %92 = vmatpush1.xpose.msra.mxu0 0.0
    %93 = vmatprep.subr.mxu0 0.0
    %94 = vmatpush1.xpose.msra.mxu0 0.0
    %95 = vmatprep.subr.mxu0 0.0
    %96 = vmatpush1.xpose.msra.mxu0 0.0
    %97 = vmatprep.subr.mxu0 0.0
    %98 = vmatpush1.xpose.msra.mxu0 0.0
    %99 = vmatprep.subr.mxu0 0.0
    %100 = vmatpush1.xpose.msra.mxu0 0.0
    %101 = vmatprep.subr.mxu0 0.0
    %102 = vmatpush1.xpose.msra.mxu0 0.0
    %103 = vmatprep.subr.mxu0 0.0
    %104 = vmatpush1.xpose.msra.mxu0 0.0
    %105 = vmatprep.subr.mxu0 0.0
    %106 = vmatpush1.xpose.msra.mxu0 0.0
    %107 = vmatprep.mubr.f32.mxu0 %v41
    %108 = vmatmul.mubr.f32.gmra.mrb[0].mxu0 %v36
    %v109 = vpop.f32.mrb[0].mxu0
    %v110 = vadd.f32 0.0, %v109
    %v111 = vpop.f32.mrb[0].mxu0
    %112 = vdwg.mxu0
    %v114 = vcombine.high %v37, %v37
    %116 = vmatprep.subr.mxu0 %v114
    %117 = vmatpush1.xpose.msra.mxu0 %v37
    %118 = vmatprep.subr.mxu0 0.0
    %119 = vmatpush1.xpose.msra.mxu0 0.0
    %120 = vmatprep.subr.mxu0 0.0
    %121 = vmatpush1.xpose.msra.mxu0 0.0
    %122 = vmatprep.subr.mxu0 0.0
    %123 = vmatpush1.xpose.msra.mxu0 0.0
    %124 = vmatprep.subr.mxu0 0.0
    %125 = vmatpush1.xpose.msra.mxu0 0.0
    %126 = vmatprep.subr.mxu0 0.0
    %127 = vmatpush1.xpose.msra.mxu0 0.0
    %128 = vmatprep.subr.mxu0 0.0
    %129 = vmatpush1.xpose.msra.mxu0 0.0
    %130 = vmatprep.subr.mxu0 0.0
    %131 = vmatpush1.xpose.msra.mxu0 0.0
    %132 = vmatprep.subr.mxu0 0.0
    %133 = vmatpush1.xpose.msra.mxu0 0.0
    %134 = vmatprep.subr.mxu0 0.0
    %135 = vmatpush1.xpose.msra.mxu0 0.0
    %136 = vmatprep.subr.mxu0 0.0
    %137 = vmatpush1.xpose.msra.mxu0 0.0
    %138 = vmatprep.subr.mxu0 0.0
    %139 = vmatpush1.xpose.msra.mxu0 0.0
    %140 = vmatprep.subr.mxu0 0.0
    %141 = vmatpush1.xpose.msra.mxu0 0.0
    %142 = vmatprep.subr.mxu0 0.0
    %143 = vmatpush1.xpose.msra.mxu0 0.0
    %144 = vmatprep.subr.mxu0 0.0
    %145 = vmatpush1.xpose.msra.mxu0 0.0
    %146 = vmatprep.subr.mxu0 0.0
    %147 = vmatpush1.xpose.msra.mxu0 0.0
    %148 = vmatprep.subr.mxu0 0.0
    %149 = vmatpush1.xpose.msra.mxu0 0.0
    %150 = vmatprep.subr.mxu0 0.0
    %151 = vmatpush1.xpose.msra.mxu0 0.0
    %152 = vmatprep.subr.mxu0 0.0
    %153 = vmatpush1.xpose.msra.mxu0 0.0
    %154 = vmatprep.subr.mxu0 0.0
    %155 = vmatpush1.xpose.msra.mxu0 0.0
    %156 = vmatprep.subr.mxu0 0.0
    %157 = vmatpush1.xpose.msra.mxu0 0.0
    %158 = vmatprep.subr.mxu0 0.0
    %159 = vmatpush1.xpose.msra.mxu0 0.0
    %160 = vmatprep.subr.mxu0 0.0
    %161 = vmatpush1.xpose.msra.mxu0 0.0
    %162 = vmatprep.subr.mxu0 0.0
    %163 = vmatpush1.xpose.msra.mxu0 0.0
    %164 = vmatprep.subr.mxu0 0.0
    %165 = vmatpush1.xpose.msra.mxu0 0.0
    %166 = vmatprep.subr.mxu0 0.0
    %167 = vmatpush1.xpose.msra.mxu0 0.0
    %168 = vmatprep.subr.mxu0 0.0
    %169 = vmatpush1.xpose.msra.mxu0 0.0
    %170 = vmatprep.subr.mxu0 0.0
    %171 = vmatpush1.xpose.msra.mxu0 0.0
    %172 = vmatprep.subr.mxu0 0.0
    %173 = vmatpush1.xpose.msra.mxu0 0.0
    %174 = vmatprep.subr.mxu0 0.0
    %175 = vmatpush1.xpose.msra.mxu0 0.0
    %176 = vmatprep.subr.mxu0 0.0
    %177 = vmatpush1.xpose.msra.mxu0 0.0
    %178 = vmatprep.subr.mxu0 0.0
    %179 = vmatpush1.xpose.msra.mxu0 0.0
    %180 = vmatprep.mubr.f32.mxu0 %v114
    %181 = vmatmul.mubr.f32.gmra.mrb[0].mxu0 %v37
    %v182 = vpop.f32.mrb[0].mxu0
    %v183 = vadd.f32 0.0, %v182
    %v184 = vpop.f32.mrb[0].mxu0
    %185 = vdwg.mxu0
    %v186 = vadd.f32 %v38, %v110
    %v187 = vadd.f32 %v39, %v183
    %vm188 = vcmask 27648
    %189 = vst.msk [vmem:[#allocation2] sm:$0xf] %vm188, %v186
    %190 = vst.msk [vmem:[#allocation2 + $0x4] sm:$0xf] %vm188, %v187
    // Predicated region
    $region14: #{tpu_custom_call.1} parent=1 // pred_check
      %p191 = pneg %p29
    $region15: #{tpu_custom_call.1} parent=1 // pred_check_branch
      %193 = sbr.rel (%p191) target = $region17
    $region16: #{tpu_custom_call.1} parent=1 // pred_region
      %v194 = vld [vmem:[#allocation2] sm:$0xf]
      %v195 = vld [vmem:[#allocation2 + $0x4] sm:$0xf]
      %196 = vst.msk [vmem:[#allocation6] sm:$0xf] %vm188, %v194
      %197 = vst.msk [vmem:[#allocation6 + $0x4] sm:$0xf] %vm188, %v195
    $region17: #{tpu_custom_call.1} parent=1 // pred_fallthru
      _
    // Predicated region
    $region18: #{tpu_custom_call.1} parent=1 // pred_check
      _
    $region19: #{tpu_custom_call.1} parent=1 // pred_check_branch
      %199 = sbr.rel (0) target = $region21
    $region20: #{tpu_custom_call.1} parent=1 // pred_region
      %s201 = ssub.s32 128, 128
      %202 = vsyncadd [#allocation5], %s201
      %s203 = sshll.u32 [#allocation6], 4
      %s204 = int_to_ptr.vmem [resolvable:$true] %s203
      %209 = dma.vmem_to_hbm [thread:$0]  %s204, 128, %s1, [#allocation5], 64, 64, 4
    $region21: #{tpu_custom_call.1} parent=1 // pred_fallthru
      _
    // Predicated region
    $region22: #{tpu_custom_call.1} parent=1 // pred_check
      _
    $region23: #{tpu_custom_call.1} parent=1 // pred_check_branch
      %211 = sbr.rel (0) target = $region25
    $region24: #{tpu_custom_call.1} parent=1 // pred_region
      %212 = dma.done [#allocation5], 128
    $region25: #{tpu_custom_call.1} parent=1 // pred_fallthru
      _
    %213 = vsyncpa [#allocation4], 1
    %214 = vsyncpa [#allocation5], 1

</llo_original>
